<compile_context>
chip_gen: v6e
topology: v6e:2x2x1
jax: 0.10.0
libtpu: 0.0.40
codegen_flags: <defaults>
</compile_context>

<pallas_src>
import functools

import jax
import jax.numpy as jnp
from jax import lax
from jax.experimental import pallas as pl
from jax.experimental.pallas import tpu as pltpu

ETA = 0.1  # TODO(synk): deterministic stand-in for args.eta from the reference script.

LANE = 512      # lane-dense block width (multiple of 128)
SUB = 8         # sublane rows per block


def permutation_tensor(n: int) -> jnp.ndarray:
    M = jnp.eye(n, dtype=jnp.float32)
    return jnp.concatenate([M[n // 2:], -M[: n // 2]], axis=0)


def duffing_kernel(x_ref, out_ref, *, eta: float):
    # x_ref / out_ref: (SUB, LANE) f32, lanes interleaved [q0, p0, q1, p1, ...].
    x = x_ref[...]
    lane_axis = x.ndim - 1          # pltpu.roll needs a non-negative axis
    lane_n = x.shape[lane_axis]

    # Circular lane rotations (XLU slot — co-issues with the VPU work).
    x_next = pltpu.roll(x, shift=lane_n - 1, axis=lane_axis)   # x_next[j] = x[j + 1] -> p at even j
    x_prev = pltpu.roll(x, shift=1, axis=lane_axis)            # x_prev[j] = x[j - 1] -> q at odd j

    lane = lax.broadcasted_iota(jnp.int32, x.shape, dimension=lane_axis)
    is_q_pos = (lane & 1) == 0

    # even (q) positions: output = p                      = x_next
    # odd  (p) positions: output = q - q^3 - eta * p      (q = x_prev, p = x)
    odd_out = x_prev - x_prev * x_prev * x_prev - eta * x
    out_ref[...] = jnp.where(is_q_pos, x_next, odd_out).astype(out_ref.dtype)


def ode_duffing_forward(x: jnp.ndarray, eta: float = ETA) -> jnp.ndarray:
    """x: (B, 2) float32 (PyTorch layout). Returns field of shape (B, 2)."""
    B, D = x.shape
    assert D == 2, "Duffing system has 2 coordinates (q, p)."
    n = B * D

    # Flatten to the interleaved lane-dense view; pad to a whole number of blocks.
    block_elems = SUB * LANE
    n_pad = (-n) % block_elems
    flat = x.reshape(-1)
    if n_pad:
        flat = jnp.pad(flat, (0, n_pad))
    rows = flat.size // LANE
    x2d = flat.reshape(rows, LANE)

    kernel = functools.partial(duffing_kernel, eta=eta)
    out2d = pl.pallas_call(
        kernel,
        out_shape=jax.ShapeDtypeStruct((rows, LANE), x.dtype),
        grid=(rows // SUB,),
        in_specs=[pl.BlockSpec((SUB, LANE), lambda i: (i, 0))],
        out_specs=pl.BlockSpec((SUB, LANE), lambda i: (i, 0)),
        compiler_params=pltpu.CompilerParams(dimension_semantics=("parallel",)),
    )(x2d)

    return out2d.reshape(-1)[:n].reshape(B, D)


def _reference(x, eta=ETA):
    # Mirrors the PyTorch module exactly (with the analytic gradient of H).
    q = x[:, 0]
    p = x[:, 1]
    dH = jnp.stack([q ** 3 - q, p], axis=1)
    M = permutation_tensor(2)
    field = dH @ M.T
    dH = dH.at[:, 0].set(0.0)
    return field - eta * dH


if __name__ == "__main__":
    key = jax.random.PRNGKey(0)
    B, D = 256, 2                     # input_dim = 2 (q, p)
    x = jax.random.normal(key, (B, D), dtype=jnp.float32)

    out = ode_duffing_forward(x)
    out = jax.block_until_ready(out)

    ref = _reference(x)
    assert out.shape == (B, D)
    assert jnp.allclose(out, ref, atol=1e-5, rtol=1e-5)
    print("KERNEL_OK")
</pallas_src>

<mosaic_0001>
module attributes {stable_mosaic.version = 11 : i64} {
  func.func @duffing_kernel(%arg0: i32, %arg1: memref<8x512xf32, #tpu.memory_space<vmem>>, %arg2: memref<8x512xf32, #tpu.memory_space<vmem>>) attributes {dimension_semantics = [#tpu.dimension_semantics<parallel>], iteration_bounds = array<i64: 1>, scalar_prefetch = 0 : i64, scratch_operands = 0 : i64, tpu.core_type = #tpu.core_type<tc>, window_params = [{transform_indices = @transform_0, window_bounds = array<i64: 8, 512>}, {transform_indices = @transform_1, window_bounds = array<i64: 8, 512>}]} {
    %c0 = arith.constant 0 : index
    %c0_0 = arith.constant 0 : index
    %0 = vector.load %arg1[%c0, %c0_0] : memref<8x512xf32, #tpu.memory_space<vmem>>, vector<8x512xf32>
    %c511_i32 = arith.constant 511 : i32
    %1 = tpu.dynamic_rotate %0 by %c511_i32 dim 1 : vector<8x512xf32>, i32 -> vector<8x512xf32>
    %c1_i32 = arith.constant 1 : i32
    %2 = tpu.dynamic_rotate %0 by %c1_i32 dim 1 : vector<8x512xf32>, i32 -> vector<8x512xf32>
    %3 = tpu.iota {dimensions = array<i32: 1>} : vector<8x512xi32>
    %c1_i32_1 = arith.constant 1 : i32
    %4 = vector.broadcast %c1_i32_1 : i32 to vector<8x512xi32>
    %5 = arith.andi %3, %4 : vector<8x512xi32>
    %c0_i32 = arith.constant 0 : i32
    %6 = vector.broadcast %c0_i32 : i32 to vector<8x512xi32>
    %7 = arith.cmpi eq, %5, %6 : vector<8x512xi32>
    %8 = arith.mulf %2, %2 : vector<8x512xf32>
    %9 = arith.mulf %8, %2 : vector<8x512xf32>
    %10 = arith.subf %2, %9 : vector<8x512xf32>
    %cst = arith.constant 1.000000e-01 : f32
    %11 = vector.broadcast %cst : f32 to vector<8x512xf32>
    %12 = arith.mulf %11, %0 : vector<8x512xf32>
    %13 = arith.subf %10, %12 : vector<8x512xf32>
    %14 = arith.select %7, %1, %13 : vector<8x512xi1>, vector<8x512xf32>
    %c0_2 = arith.constant 0 : index
    %c0_3 = arith.constant 0 : index
    %15 = vector.load %arg2[%c0_2, %c0_3] : memref<8x512xf32, #tpu.memory_space<vmem>>, vector<8x512xf32>
    tpu.vector_store %arg2[%c0_2, %c0_3], %14 {strides = array<i32>} : memref<8x512xf32, #tpu.memory_space<vmem>>, vector<8x512xf32>,
    return
  }
  func.func @transform_0(%arg0: i32) -> (i32, i32) {
    %c0_i32 = arith.constant 0 : i32
    %c0_i32_0 = arith.constant 0 : i32
    return %arg0, %c0_i32 : i32, i32
  }
  func.func @transform_1(%arg0: i32) -> (i32, i32) {
    %c0_i32 = arith.constant 0 : i32
    %c0_i32_0 = arith.constant 0 : i32
    return %arg0, %c0_i32 : i32, i32
  }
}

</mosaic_0001>

<llo_original>
// kernel: tpu_custom_call.1
$region0: #{tpu_custom_call.1}
  #allocation0 [shape = 'u32[]', space=smem, size = 0x4, offset = 0x4, fixed_abs, tag = 'smem constant byte address 0x4 - core index']
  #allocation1 [shape = 'u32[144,128]{1,0:T(1,128)}', space=vmem, size = 0x12000, scoped, tag = 'internal scratch']
  %s0 = inlined_call_operand.hbm [shape: f32[8,512], index: 0, kind: input, shape index: {}]
  %s1 = inlined_call_operand.hbm [shape: f32[8,512], index: 1, kind: output, shape index: {}]
  %s2 = sld [smem:[#allocation0]]
  $region18: #{tpu_custom_call.1} parent=0
    _
  %s4 = ssub.s32 1, %s2
  %s5 = scalar_select 0, %s4, %s2
  $region1: #{tpu_custom_call.1} parent=0
    #allocation2 [shape = 'u8[16384]{0}', space=vmem, size = 0x4000, scoped, tag = 'input window, operand 0, single buffered']
    #allocation3 [shape = 's32[1]{0}', space=sflag, size = 0x4, scoped, tag = 'scoped memory for tpu_custom_call.1']
    #allocation4 [shape = 's32[1]{0}', space=sflag, size = 0x4, scoped, tag = 'scoped memory for tpu_custom_call.1']
    #allocation5 [shape = 'u8[16384]{0}', space=vmem, size = 0x4000, scoped, tag = 'output window, operand 0, single buffered']
    %6 = vsyncpa [#allocation3], 0
    %7 = vsyncpa [#allocation4], 0
    // Predicated region
    $region2: #{tpu_custom_call.1} parent=1 // pred_check
      _
    $region3: #{tpu_custom_call.1} parent=1 // pred_check_branch
      %9 = sbr.rel (0) target = $region5
    $region4: #{tpu_custom_call.1} parent=1 // pred_region
      %s11 = ssub.s32 512, 512
      %12 = vsyncadd [#allocation3], %s11
      %s14 = sshll.u32 [#allocation2], 4
      %s15 = int_to_ptr.vmem [resolvable:$true] %s14
      %17 = dma.hbm_to_vmem [thread:$0]  %s0, 512, %s15, [#allocation3]
    $region5: #{tpu_custom_call.1} parent=1 // pred_fallthru
      _
    // Predicated region
    $region6: #{tpu_custom_call.1} parent=1 // pred_check
      _
    $region7: #{tpu_custom_call.1} parent=1 // pred_check_branch
      %19 = sbr.rel (0) target = $region9
    $region8: #{tpu_custom_call.1} parent=1 // pred_region
      %20 = dma.done [#allocation3], 512
    $region9: #{tpu_custom_call.1} parent=1 // pred_fallthru
      _
    %v21 = vld [vmem:[#allocation2] sm:$0xff]
    %v22 = vld [vmem:[#allocation2 + $0x8] sm:$0xff]
    %v23 = vld [vmem:[#allocation2 + $0x10] sm:$0xff]
    %v24 = vld [vmem:[#allocation2 + $0x18] sm:$0xff]
    %25 = vrot.lane.b32.xlu0 %v21, 127
    %v26 = vpop.permute.xlu0 %25
    %27 = vrot.lane.b32.xlu0 %v22, 127
    %v28 = vpop.permute.xlu0 %27
    %29 = vrot.lane.b32.xlu0 %v23, 127
    %v30 = vpop.permute.xlu0 %29
    %31 = vrot.lane.b32.xlu0 %v24, 127
    %v32 = vpop.permute.xlu0 %31
    %v33 = vlaneseq
    %v34 = vand.u32 %v33, 127
    %vm35 = vcmp.lt.s32.totalorder %v34, 127
    %v36 = vsel %vm35, %v30, %v32
    %v37 = vsel %vm35, %v28, %v30
    %v38 = vsel %vm35, %v26, %v28
    %v39 = vsel %vm35, %v32, %v26
    %40 = vrot.lane.b32.xlu0 %v21, 1
    %v41 = vpop.permute.xlu0 %40
    %42 = vrot.lane.b32.xlu0 %v22, 1
    %v43 = vpop.permute.xlu0 %42
    %44 = vrot.lane.b32.xlu0 %v23, 1
    %v45 = vpop.permute.xlu0 %44
    %46 = vrot.lane.b32.xlu0 %v24, 1
    %v47 = vpop.permute.xlu0 %46
    %vm48 = vcmp.lt.s32.totalorder %v34, 1
    %v49 = vsel %vm48, %v45, %v47
    %v50 = vsel %vm48, %v43, %v45
    %v51 = vsel %vm48, %v41, %v43
    %v52 = vsel %vm48, %v47, %v41
    %v53 = vadd.s32 %v34, 128
    %v54 = vadd.s32 %v34, 256
    %v55 = vadd.s32 %v34, 384
    %v56 = vand.u32 %v34, 1
    %v57 = vand.u32 %v53, 1
    %v58 = vand.u32 %v54, 1
    %v59 = vand.u32 %v55, 1
    %vm60 = vcmp.eq.s32.totalorder %v56, 0
    %vm61 = vcmp.eq.s32.totalorder %v57, 0
    %vm62 = vcmp.eq.s32.totalorder %v58, 0
    %vm63 = vcmp.eq.s32.totalorder %v59, 0
    %v64 = vmul.f32 %v52, %v52
    %v65 = vmul.f32 %v51, %v51
    %v66 = vmul.f32 %v50, %v50
    %v67 = vmul.f32 %v49, %v49
    %v68 = vmul.f32 %v64, %v52
    %v69 = vmul.f32 %v65, %v51
    %v70 = vmul.f32 %v66, %v50
    %v71 = vmul.f32 %v67, %v49
    %v72 = vsub.f32 %v52, %v68
    %v73 = vsub.f32 %v51, %v69
    %v74 = vsub.f32 %v50, %v70
    %v75 = vsub.f32 %v49, %v71
    %v76 = vmul.f32 %v21, 0.1
    %v77 = vmul.f32 %v22, 0.1
    %v78 = vmul.f32 %v23, 0.1
    %v79 = vmul.f32 %v24, 0.1
    %v80 = vsub.f32 %v72, %v76
    %v81 = vsub.f32 %v73, %v77
    %v82 = vsub.f32 %v74, %v78
    %v83 = vsub.f32 %v75, %v79
    %v84 = vsel %vm60, %v38, %v80
    %v85 = vsel %vm61, %v37, %v81
    %v86 = vsel %vm62, %v36, %v82
    %v87 = vsel %vm63, %v39, %v83
    %88 = vst [vmem:[#allocation5] sm:$0xff] %v84
    %89 = vst [vmem:[#allocation5 + $0x8] sm:$0xff] %v85
    %90 = vst [vmem:[#allocation5 + $0x10] sm:$0xff] %v86
    %91 = vst [vmem:[#allocation5 + $0x18] sm:$0xff] %v87
    // Predicated region
    $region10: #{tpu_custom_call.1} parent=1 // pred_check
      _
    $region11: #{tpu_custom_call.1} parent=1 // pred_check_branch
      %93 = sbr.rel (0) target = $region13
    $region12: #{tpu_custom_call.1} parent=1 // pred_region
      %s95 = ssub.s32 512, 512
      %96 = vsyncadd [#allocation4], %s95
      %s98 = sshll.u32 [#allocation5], 4
      %s99 = int_to_ptr.vmem [resolvable:$true] %s98
      %101 = dma.vmem_to_hbm [thread:$0]  %s99, 512, %s1, [#allocation4]
    $region13: #{tpu_custom_call.1} parent=1 // pred_fallthru
      _
    // Predicated region
    $region14: #{tpu_custom_call.1} parent=1 // pred_check
      _
    $region15: #{tpu_custom_call.1} parent=1 // pred_check_branch
      %103 = sbr.rel (0) target = $region17
    $region16: #{tpu_custom_call.1} parent=1 // pred_region
      %104 = dma.done [#allocation4], 512
    $region17: #{tpu_custom_call.1} parent=1 // pred_fallthru
      _
    %105 = vsyncpa [#allocation3], 1
    %106 = vsyncpa [#allocation4], 1

</llo_original>
